<compile_context>
chip_gen: v6e
topology: v6e:2x2x1
jax: 0.10.0
libtpu: 0.0.40
codegen_flags: <defaults>
</compile_context>

<pallas_src>
import functools

import jax
import jax.numpy as jnp
from jax import lax
from jax.experimental import pallas as pl
from jax.experimental.pallas import tpu as pltpu

_MIB = 1024 * 1024

# x:(tm, K) . w:(tn, K) contracting the shared last axis -> (tm, tn)
_CONTRACT_LAST = (((1,), (1,)), ((), ()))


# ----------------------------------------------------------------------------
# Kernels
# ----------------------------------------------------------------------------
def _encoder_kernel_fullk(x_ref, w_ref, o_ref):
    proj = lax.dot_general(
        x_ref[...], w_ref[...],
        dimension_numbers=_CONTRACT_LAST,
        preferred_element_type=jnp.float32,
    )
    # hard_quantize: > 0 -> +1, otherwise -> -1 (compare in f32, cast at store)
    o_ref[...] = jnp.where(proj > 0, 1.0, -1.0).astype(o_ref.dtype)


def _encoder_kernel_ksplit(x_ref, w_ref, o_ref, acc_ref):
    # grid = (B//tm, OUT//tn, SIZE//tk); K (reduction) is the last axis.
    @pl.when(pl.program_id(2) == 0)
    def _():
        acc_ref[...] = jnp.zeros_like(acc_ref)

    acc_ref[...] += lax.dot_general(
        x_ref[...], w_ref[...],
        dimension_numbers=_CONTRACT_LAST,
        preferred_element_type=jnp.float32,
    )

    @pl.when(pl.program_id(2) == pl.num_programs(2) - 1)
    def _():
        o_ref[...] = jnp.where(acc_ref[...] > 0, 1.0, -1.0).astype(o_ref.dtype)


# ----------------------------------------------------------------------------
# Tiling helpers
# ----------------------------------------------------------------------------
def _cdiv(a, b):
    return -(-a // b)


def _round_up(v, m):
    return ((v + m - 1) // m) * m


@functools.lru_cache(maxsize=1)
def _vmem_capacity_bytes():
    try:
        return int(pltpu.get_tpu_info().vmem_capacity_bytes)
    except Exception:
        return 64 * _MIB  # conservative (v7x size); v5e/v6e have 128 MiB


def _pick_lane_tile(dim, max_tile):
    """Lane (last output dim) tile: a multiple of 128, or the full extent."""
    if dim <= max(128, max_tile):
        return dim                       # full extent is always a legal block
    max_tile = max(128, (max_tile // 128) * 128)
    for cand in range(max_tile, 127, -128):
        if dim % cand == 0:
            return cand                  # exact divisor -> no masked stores
    return max_tile                      # ragged last tile (cdiv grid)


def _pick_divisor_tile(dim, target, aligns=(512, 256, 128)):
    """Largest 128-aligned tile <= target that divides dim exactly (K axis)."""
    if dim <= target:
        return dim                       # full extent: always legal
    for align in aligns:
        t = (min(target, dim) // align) * align
        while t >= align:
            if dim % t == 0:
                return t
            t -= align
    return None


def _fullk_bytes(tm, tn, k, xb, wb, ob):
    # double-buffered x strip + double-buffered (resident) W strip + out tiles
    return 2 * tm * k * xb + 2 * tn * k * wb + 2 * tm * tn * ob


def _ksplit_bytes(tm, tn, tk, xb, wb, ob):
    return 2 * tm * tk * xb + 2 * tn * tk * wb + 2 * tm * tn * ob + tm * tn * 4


# ----------------------------------------------------------------------------
# Wrapper
# ----------------------------------------------------------------------------
@functools.partial(jax.jit, static_argnames=("out_dtype", "vmem_budget_bytes"))
def encoder_forward(x, weight, *, out_dtype=jnp.float32, vmem_budget_bytes=None):
    """x: (B, size), weight: (out_features, size) -> (B, out_features) in {-1,+1}.

    Pass bf16 `weight` (held persistently by the caller -- the projection is a
    fixed random matrix) to halve the dominant HBM stream; accumulation stays
    f32.  `out_dtype` may be set to int8/bf16 to shrink output writeback.
    """
    B, size = x.shape
    out_features, size_w = weight.shape
    if size_w != size:
        raise ValueError("weight must have shape (out_features, size)")

    # Stream in the weight's precision; everything else computes/accumulates
    # in f32 (matches the torch module when weights are f32).
    cdtype = jnp.bfloat16 if weight.dtype == jnp.bfloat16 else jnp.float32
    weight = weight.astype(cdtype)
    x = x.astype(cdtype)

    xb = wb = jnp.dtype(cdtype).itemsize
    ob = jnp.dtype(out_dtype).itemsize

    cap = _vmem_capacity_bytes()
    budget = int(vmem_budget_bytes) if vmem_budget_bytes else int(0.7 * cap)

    # Batch tile (sublane dim): multiple of 8, or the full extent.
    tm = B if B <= 256 else 256

    # ---- full-K path: largest 128-aligned W strip that fits the budget ------
    tn_cap = 2048
    while tn_cap > 128 and _fullk_bytes(tm, tn_cap, size, xb, wb, ob) > budget:
        tn_cap -= 128
    tn = _pick_lane_tile(out_features, tn_cap)
    if out_features > 256 and _cdiv(out_features, tn) < 2:
        # keep >= 2 output strips so both v7x TensorCores get work
        tn = _pick_lane_tile(out_features, _round_up(_cdiv(out_features, 2), 128))
    use_full_k = _fullk_bytes(tm, tn, size, xb, wb, ob) <= budget

    if use_full_k:
        # Grid (j, i), batch innermost: W block index constant along i => the
        # (tn, size) strip stays resident and W is read from HBM exactly once.
        grid = (_cdiv(out_features, tn), _cdiv(B, tm))
        in_specs = [
            pl.BlockSpec((tm, size), lambda j, i: (i, 0)),
            pl.BlockSpec((tn, size), lambda j, i: (j, 0)),
        ]
        out_specs = pl.BlockSpec((tm, tn), lambda j, i: (i, j))
        scratch_shapes = []
        kernel = _encoder_kernel_fullk
        dim_sem = ("parallel", "arbitrary")
        footprint = _fullk_bytes(tm, tn, size, xb, wb, ob)
    else:
        # ---- K-split fallback (very large size): f32 accumulator, K last ----
        tk_target = 4096 if wb <= 2 else 2048
        tk = _pick_divisor_tile(size, tk_target)
        if tk is None:
            # K has no 128-aligned divisor: zero-pad the reduction axis (zeros
            # do not change x @ W^T).  Costs one extra pass over W; only hit on
            # pathological sizes.
            pad = _round_up(size, 512) - size
            x = jnp.pad(x, ((0, 0), (0, pad)))
            weight = jnp.pad(weight, ((0, 0), (0, pad)))
            size += pad
            tk = _pick_divisor_tile(size, tk_target)
        tn = _pick_lane_tile(out_features, 1024)
        while _ksplit_bytes(tm, tn, tk, xb, wb, ob) > budget:
            if tk >= 256 and (tk // 2) % 128 == 0 and size % (tk // 2) == 0:
                tk //= 2
            elif tn > 128:
                tn = max(128, ((tn // 2) // 128) * 128)
            elif tm > 8:
                tm = max(8, (tm // 2 // 8) * 8)
            else:
                break
        grid = (_cdiv(B, tm), _cdiv(out_features, tn), size // tk)
        in_specs = [
            pl.BlockSpec((tm, tk), lambda i, j, k: (i, k)),
            pl.BlockSpec((tn, tk), lambda i, j, k: (j, k)),
        ]
        out_specs = pl.BlockSpec((tm, tn), lambda i, j, k: (i, j))
        scratch_shapes = [pltpu.VMEM((tm, tn), jnp.float32)]
        kernel = _encoder_kernel_ksplit
        dim_sem = ("parallel", "parallel", "arbitrary")
        footprint = _ksplit_bytes(tm, tn, tk, xb, wb, ob)

    # Leave headroom below physical VMEM for compiler-internal scratch (matters
    # on v7x's 64 MiB); allow > 64 MiB on v5e/v6e (128 MiB physical).
    vmem_limit = int(min(cap - 8 * _MIB,
                         max(32 * _MIB, int(1.25 * footprint) + 2 * _MIB)))

    return pl.pallas_call(
        kernel,
        out_shape=jax.ShapeDtypeStruct((B, out_features), out_dtype),
        grid_spec=pltpu.PrefetchScalarGridSpec(
            num_scalar_prefetch=0,
            grid=grid,
            in_specs=in_specs,
            out_specs=out_specs,
            scratch_shapes=scratch_shapes,
        ),
        compiler_params=pltpu.CompilerParams(
            dimension_semantics=dim_sem,
            vmem_limit_bytes=vmem_limit,
        ),
    )(x, weight)


def encoder_reference(x, weight):
    proj = jnp.dot(x.astype(jnp.float32), weight.astype(jnp.float32).T)
    return jnp.where(proj > 0, 1.0, -1.0)


# ----------------------------------------------------------------------------
# Demo / self-test
# ----------------------------------------------------------------------------
if __name__ == "__main__":
    key = jax.random.PRNGKey(0)

    def _check(B, SIZE, OUT, k, *, weight_dtype=jnp.float32, min_match=0.999,
               vmem_budget_bytes=None):
        kx, kw = jax.random.split(k)
        x = jax.random.normal(kx, (B, SIZE), dtype=jnp.float32)
        # torchhd Projection init: W ~ N(0, 1), shape (out_features, size)
        weight = jax.random.normal(kw, (OUT, SIZE), dtype=jnp.float32)
        weight = weight.astype(weight_dtype)

        out = encoder_forward(x, weight, vmem_budget_bytes=vmem_budget_bytes)
        jax.block_until_ready(out)

        ref = encoder_reference(x.astype(weight_dtype), weight)
        assert out.shape == (B, OUT)
        assert bool(jnp.all(jnp.abs(out) == 1.0))
        # Tiled / MXU accumulation order can flip signs only where |proj| ~ 0.
        match = float(jnp.mean((out == ref).astype(jnp.float32)))
        assert match >= min_match, f"sign match too low: {match}"

    k1, k2, k3, k4 = jax.random.split(key, 4)
    _check(8, 256, 1024, k1)                                   # full-K, f32, W-resident
    _check(16, 512, 2048, k2, weight_dtype=jnp.bfloat16)       # full-K, bf16 W streaming
    _check(8, 256, 1000, k3)                                   # ragged out_features (masked last strip)
    _check(8, 1024, 512, k4, vmem_budget_bytes=1 << 20)        # forced K-split accumulator path

    print("KERNEL_OK")
</pallas_src>

<mosaic_0001>
module attributes {stable_mosaic.version = 11 : i64} {
  func.func @_encoder_kernel_fullk(%arg0: i32, %arg1: i32, %arg2: memref<8x256xf32, #tpu.memory_space<vmem>>, %arg3: memref<512x256xf32, #tpu.memory_space<vmem>>, %arg4: memref<8x512xf32, #tpu.memory_space<vmem>>) attributes {dimension_semantics = [#tpu.dimension_semantics<parallel>, #tpu.dimension_semantics<arbitrary>], iteration_bounds = array<i64: 2, 1>, scalar_prefetch = 0 : i64, scratch_operands = 0 : i64, tpu.core_type = #tpu.core_type<tc>, window_params = [{transform_indices = @transform_0, window_bounds = array<i64: 8, 256>}, {transform_indices = @transform_1, window_bounds = array<i64: 512, 256>}, {transform_indices = @transform_2, window_bounds = array<i64: 8, 512>}]} {
    %c0 = arith.constant 0 : index
    %c0_0 = arith.constant 0 : index
    %0 = vector.load %arg2[%c0, %c0_0] : memref<8x256xf32, #tpu.memory_space<vmem>>, vector<8x256xf32>
    %c0_1 = arith.constant 0 : index
    %c0_2 = arith.constant 0 : index
    %1 = vector.load %arg3[%c0_1, %c0_2] : memref<512x256xf32, #tpu.memory_space<vmem>>, vector<512x256xf32>
    %cst = arith.constant dense<0.000000e+00> : vector<8x512xf32>
    %2 = tpu.matmul %0, %1, %cst {dimension_numbers = #tpu.dot_dimension_numbers<[1], [1], [0], [0], [0, 0, 1, 0], [], []>} : vector<8x256xf32>, vector<512x256xf32>, vector<8x512xf32> -> vector<8x512xf32>
    %cst_3 = arith.constant 0.000000e+00 : f32
    %3 = vector.broadcast %cst_3 : f32 to vector<8x512xf32>
    %4 = arith.cmpf ogt, %2, %3 : vector<8x512xf32>
    %cst_4 = arith.constant 1.000000e+00 : f32
    %cst_5 = arith.constant -1.000000e+00 : f32
    %5 = vector.broadcast %cst_4 : f32 to vector<8x512xf32>
    %6 = vector.broadcast %cst_5 : f32 to vector<8x512xf32>
    %7 = arith.select %4, %5, %6 : vector<8x512xi1>, vector<8x512xf32>
    %c0_6 = arith.constant 0 : index
    %c0_7 = arith.constant 0 : index
    %8 = vector.load %arg4[%c0_6, %c0_7] : memref<8x512xf32, #tpu.memory_space<vmem>>, vector<8x512xf32>
    tpu.vector_store %arg4[%c0_6, %c0_7], %7 {strides = array<i32>} : memref<8x512xf32, #tpu.memory_space<vmem>>, vector<8x512xf32>,
    return
  }
  func.func @transform_0(%arg0: i32, %arg1: i32) -> (i32, i32) {
    %c0_i32 = arith.constant 0 : i32
    %c0_i32_0 = arith.constant 0 : i32
    return %arg1, %c0_i32 : i32, i32
  }
  func.func @transform_1(%arg0: i32, %arg1: i32) -> (i32, i32) {
    %c0_i32 = arith.constant 0 : i32
    %c0_i32_0 = arith.constant 0 : i32
    return %arg0, %c0_i32 : i32, i32
  }
  func.func @transform_2(%arg0: i32, %arg1: i32) -> (i32, i32) {
    %c0_i32 = arith.constant 0 : i32
    return %arg1, %arg0 : i32, i32
  }
}

</mosaic_0001>

<llo_original>
// kernel: encoder_forward.1
$region0: #{encoder_forward.1}
  #allocation0 [shape = 'u32[]', space=smem, size = 0x4, offset = 0x4, fixed_abs, tag = 'smem constant byte address 0x4 - core index']
  #allocation1 [shape = 'u32[144,128]{1,0:T(1,128)}', space=vmem, size = 0x12000, scoped, tag = 'internal scratch']
  %s0 = inlined_call_operand.hbm [shape: f32[8,256], index: 0, kind: input, shape index: {}]
  %s1 = inlined_call_operand.hbm [shape: f32[1024,256], index: 1, kind: input, shape index: {}]
  %s2 = inlined_call_operand.hbm [shape: f32[8,1024], index: 2, kind: output, shape index: {}]
  %s3 = sld [smem:[#allocation0]]
  $region49: #{encoder_forward.1} parent=0
    _
  %s5 = ssub.s32 1, %s3
  %s6 = scalar_select 0, %s5, %s3
  $region1: #{encoder_forward.1} parent=0
    #allocation2 [shape = 'u8[8192]{0}', space=vmem, size = 0x2000, scoped, tag = 'input window, operand 0, single buffered']
    #allocation3 [shape = 's32[2]{0}', space=sflag, size = 0x8, scoped, tag = 'scoped memory for encoder_forward.1']
    #allocation4 [shape = 's32[2]{0}', space=sflag, size = 0x8, scoped, tag = 'scoped memory for encoder_forward.1']
    #allocation5 [shape = 'u8[1048576]{0}', space=vmem, size = 0x100000, scoped, tag = 'input window, operand 1']
    #allocation6 [shape = 's32[2]{0}', space=sflag, size = 0x8, scoped, tag = 'scoped memory for encoder_forward.1']
    #allocation7 [shape = 'u8[32768]{0}', space=vmem, size = 0x8000, scoped, tag = 'output window, operand 0']
    %7 = vsyncpa [#allocation3], 0
    %8 = vsyncpa [#allocation6], 0
    %s9 = scalar_lea.sflag [#allocation6], 1
    %10 = vsyncpa %s9, 0
    %11 = vsyncpa [#allocation4], 0
    %s12 = scalar_lea.sflag [#allocation4], 1
    %13 = vsyncpa %s12, 0
    loop: start=0, step=1, limit=4
    $region2: #{encoder_forward.1} parent=1 // loop_pre_header
      _
    $region3: #{encoder_forward.1} parent=1 // loop_header
      %s15 = sphi 0, %s19
      %p16 = scmp.ge.s32.totalorder %s15, 4
      %s22 = sphi 0, %s34
      %s23 = sphi 0, %s30
      %s24 = sphi 0, %s22
      %s25 = sphi 0, %s23
      %s26 = sphi 0, %s24
      %s27 = sphi 0, %s25
      %s37 = sphi 0, %s39
      %s40 = sphi 0, %s37
      %s41 = sphi 0, %s40
      %s57 = sphi 0, %s41
      %s63 = sphi 0, %s65
      %s66 = sphi 0, %s63
      %s67 = sphi 0, %s66
      %s83 = sphi 0, %s67
      %s91 = sphi 0, %s93
      %s94 = sphi 0, %s91
      %s95 = sphi 0, %s94
      %s111 = sphi 0, %s95
    $region4: #{encoder_forward.1} parent=1 // loop_header_branch
      %18 = sbr.rel (%p16) target = $region8
    $region5: #{encoder_forward.1} parent=1 // loop_body
      %s20 = ssub.s32 %s15, 1
      %s21 = ssub.s32 %s15, 2
      %s28 = sadd.s32 1, %s23
      %p29 = scmp.ge.s32.totalorder %s28, 1
      %s30 = scalar_select %p29, 0, %s28
      %s31 = sadd.s32 1, %s22
      %s32 = scalar_select %p29, %s31, %s22
      %p33 = scmp.ge.s32.totalorder %s32, 2
      %s34 = scalar_select %p33, 0, %s32
      %s35 = ssub.s32 %s23, %s30
      %p36 = scmp.eq.s32.totalorder %s35, 0
      %s38 = sadd.s32 %s37, 1
      %s39 = scalar_select %p36, %s37, %s38
      %p42 = pneg %p36
      %p43 = scmp.eq.s32.totalorder %s15, 1
      %p44 = por %p42, %p43
      %p45 = scmp.ne.s32.totalorder %s37, %s40
      %p46 = scmp.eq.s32.totalorder %s15, 0
      %p47 = por %p45, %p46
      %p48 = scmp.ne.s32.totalorder %s37, %s40
      %p49 = scmp.eq.s32.totalorder %s20, 1
      %p50 = por %p48, %p49
      %p51 = scmp.ne.s32.totalorder %s40, %s41
      %p52 = scmp.eq.s32.totalorder %s20, 0
      %p53 = por %p51, %p52
      %p54 = scmp.ne.s32.totalorder %s40, %s41
      %p55 = scmp.eq.s32.totalorder %s21, 1
      %p56 = por %p54, %p55
      %p58 = scmp.ne.s32.totalorder %s41, %s57
      %p59 = scmp.eq.s32.totalorder %s21, 0
      %p60 = por %p58, %p59
      %s61 = ssub.s32 %s22, %s34
      %p62 = scmp.eq.s32.totalorder %s61, 0
      %s64 = sadd.s32 %s63, 1
      %s65 = scalar_select %p62, %s63, %s64
      %p68 = pneg %p62
      %p69 = scmp.eq.s32.totalorder %s15, 1
      %p70 = por %p68, %p69
      %p71 = scmp.ne.s32.totalorder %s63, %s66
      %p72 = scmp.eq.s32.totalorder %s15, 0
      %p73 = por %p71, %p72
      %p74 = scmp.ne.s32.totalorder %s63, %s66
      %p75 = scmp.eq.s32.totalorder %s20, 1
      %p76 = por %p74, %p75
      %p77 = scmp.ne.s32.totalorder %s66, %s67
      %p78 = scmp.eq.s32.totalorder %s20, 0
      %p79 = por %p77, %p78
      %p80 = scmp.ne.s32.totalorder %s66, %s67
      %p81 = scmp.eq.s32.totalorder %s21, 1
      %p82 = por %p80, %p81
      %p84 = scmp.ne.s32.totalorder %s67, %s83
      %p85 = scmp.eq.s32.totalorder %s21, 0
      %p86 = por %p84, %p85
      %s87 = ssub.s32 %s23, %s30
      %s88 = ssub.s32 %s22, %s34
      %s89 = sor.u32 %s87, %s88
      %p90 = scmp.eq.s32.totalorder %s89, 0
      %s92 = sadd.s32 %s91, 1
      %s93 = scalar_select %p90, %s91, %s92
      %p96 = pneg %p90
      %p97 = scmp.eq.s32.totalorder %s15, 1
      %p98 = por %p96, %p97
      %p99 = scmp.ne.s32.totalorder %s91, %s94
      %p100 = scmp.eq.s32.totalorder %s15, 0
      %p101 = por %p99, %p100
      %p102 = scmp.ne.s32.totalorder %s91, %s94
      %p103 = scmp.eq.s32.totalorder %s20, 1
      %p104 = por %p102, %p103
      %p105 = scmp.ne.s32.totalorder %s94, %s95
      %p106 = scmp.eq.s32.totalorder %s20, 0
      %p107 = por %p105, %p106
      %p108 = scmp.ne.s32.totalorder %s94, %s95
      %p109 = scmp.eq.s32.totalorder %s21, 1
      %p110 = por %p108, %p109
      %p112 = scmp.ne.s32.totalorder %s95, %s111
      %p113 = scmp.eq.s32.totalorder %s21, 0
      %p114 = por %p112, %p113
      %p115 = scmp.le.s32.totalorder 1, %s15
      %p116 = scmp.lt.s32.totalorder %s15, 3
      %p117 = pnand %p115, %p116
      %p118 = pneg %p117
      // Predicated region
      $region9: #{encoder_forward.1} parent=5 // pred_check
        _
      $region10: #{encoder_forward.1} parent=5 // pred_check_branch
        %120 = sbr.rel (%p117) target = $region12
      $region11: #{encoder_forward.1} parent=5 // pred_region
        %s121 = ssub.s32 %s15, 1
        // Predicated region
        $region13: #{encoder_forward.1} parent=11 // pred_check
          %p122 = pneg %p53
        $region14: #{encoder_forward.1} parent=11 // pred_check_branch
          %124 = sbr.rel (%p122) target = $region16
        $region15: #{encoder_forward.1} parent=11 // pred_region
          %s126 = ssub.s32 256, 256
          %127 = vsyncadd [#allocation3], %s126
          %s128 = smul.addr %s25, 2
          %s129 = smul.addr %s128, 128
          %s130 = scalar_lea.hbm %s0, %s129
          %s132 = sshll.u32 [#allocation2], 4
          %s133 = int_to_ptr.vmem [resolvable:$true] %s132
          %135 = dma.hbm_to_vmem [thread:$0]  %s130, 256, %s133, [#allocation3]
        $region16: #{encoder_forward.1} parent=11 // pred_fallthru
          _
      $region12: #{encoder_forward.1} parent=5 // pred_fallthru
        _
      %p136 = scmp.lt.s32.totalorder %s15, 2
      // Predicated region
      $region17: #{encoder_forward.1} parent=5 // pred_check
        %p137 = pneg %p136
      $region18: #{encoder_forward.1} parent=5 // pred_check_branch
        %139 = sbr.rel (%p137) target = $region20
      $region19: #{encoder_forward.1} parent=5 // pred_region
        // Predicated region
        $region21: #{encoder_forward.1} parent=19 // pred_check
          %p140 = pneg %p73
        $region22: #{encoder_forward.1} parent=19 // pred_check_branch
          %142 = sbr.rel (%p140) target = $region24
        $region23: #{encoder_forward.1} parent=19 // pred_region
          %s143 = sand.u32 %s63, 1
          %s144 = scalar_lea.sflag [#allocation6], %s143
          %s145 = sand.u32 %s63, 1
          %s146 = smul.addr %s145, 1024
          %s147 = scalar_lea.vmem [#allocation5], %s146
          %s148 = smul.u32 64, %s22
          %s150 = ssub.s32 16384, 16384
          %151 = vsyncadd %s144, %s150
          %s152 = smul.addr %s148, 2
          %s153 = smul.addr %s152, 128
          %s154 = scalar_lea.hbm %s1, %s153
          %s155 = sshll.u32 %s147, 4
          %s156 = int_to_ptr.vmem [resolvable:$true] %s155
          %161 = dma.hbm_to_vmem [thread:$0]  %s154, 16384, %s156, %s144, 256, 256, 16
        $region24: #{encoder_forward.1} parent=19 // pred_fallthru
          _
      $region20: #{encoder_forward.1} parent=5 // pred_fallthru
        _
      %p162 = scmp.le.s32.totalorder 1, %s15
      %p163 = scmp.lt.s32.totalorder %s15, 3
      %p164 = pnand %p162, %p163
      %p165 = pneg %p164
      // Predicated region
      $region25: #{encoder_forward.1} parent=5 // pred_check
        _
      $region26: #{encoder_forward.1} parent=5 // pred_check_branch
        %167 = sbr.rel (%p164) target = $region28
      $region27: #{encoder_forward.1} parent=5 // pred_region
        %s168 = ssub.s32 %s15, 1
        // Predicated region
        $region29: #{encoder_forward.1} parent=27 // pred_check
          %p169 = pneg %p53
        $region30: #{encoder_forward.1} parent=27 // pred_check_branch
          %171 = sbr.rel (%p169) target = $region32
        $region31: #{encoder_forward.1} parent=27 // pred_region
          %172 = dma.done [#allocation3], 256
        $region32: #{encoder_forward.1} parent=27 // pred_fallthru
          _
        %s173 = sand.u32 %s66, 1
        %s174 = scalar_lea.sflag [#allocation6], %s173
        %s175 = sand.u32 %s66, 1
        %s176 = smul.addr %s175, 1024
        %s177 = scalar_lea.vmem [#allocation5], %s176
        // Predicated region
        $region33: #{encoder_forward.1} parent=27 // pred_check
          %p178 = pneg %p79
        $region34: #{encoder_forward.1} parent=27 // pred_check_branch
          %180 = sbr.rel (%p178) target = $region36
        $region35: #{encoder_forward.1} parent=27 // pred_region
          %181 = dma.done %s174, 16384
        $region36: #{encoder_forward.1} parent=27 // pred_fallthru
          _
        %p182 = pneg %p53
        %p183 = pneg %p50
        %s184 = sand.u32 %s66, 1
        %s185 = scalar_lea.sflag [#allocation6], %s184
        %s186 = sand.u32 %s66, 1
        %s187 = smul.addr %s186, 1024
        %s188 = scalar_lea.vmem [#allocation5], %s187
        %p189 = pneg %p79
        %p190 = pneg %p76
        %p191 = pneg %p107
        %p192 = pneg %p104
        %s193 = sand.u32 %s94, 1
        %s194 = scalar_lea.sflag [#allocation4], %s193
        %s195 = sand.u32 %s94, 1
        %s196 = smul.addr %s195, 32
        %s197 = scalar_lea.vmem [#allocation7], %s196
        %s198 = smul.u32 64, %s24
        %s199 = smul.u32 4, %s24
        %v200 = vld [vmem:[#allocation2] sm:$0xff]
        %v201 = vld [vmem:[#allocation2 + $0x8] sm:$0xff]
        %v202 = vld [vmem:[%s177] sm:$0xff]
        %v203 = vld [vmem:[%s177 + $0x8] sm:$0xff]
        %v204 = vld [vmem:[%s177 + $0x10] sm:$0xff]
        %v205 = vld [vmem:[%s177 + $0x18] sm:$0xff]
        %v206 = vld [vmem:[%s177 + $0x20] sm:$0xff]
        %v207 = vld [vmem:[%s177 + $0x28] sm:$0xff]
        %v208 = vld [vmem:[%s177 + $0x30] sm:$0xff]
        %v209 = vld [vmem:[%s177 + $0x38] sm:$0xff]
        %v210 = vld [vmem:[%s177 + $0x40] sm:$0xff]
        %v211 = vld [vmem:[%s177 + $0x48] sm:$0xff]
        %v212 = vld [vmem:[%s177 + $0x50] sm:$0xff]
        %v213 = vld [vmem:[%s177 + $0x58] sm:$0xff]
        %v214 = vld [vmem:[%s177 + $0x60] sm:$0xff]
        %v215 = vld [vmem:[%s177 + $0x68] sm:$0xff]
        %v216 = vld [vmem:[%s177 + $0x70] sm:$0xff]
        %v217 = vld [vmem:[%s177 + $0x78] sm:$0xff]
        %v218 = vld [vmem:[%s177 + $0x80] sm:$0xff]
        %v219 = vld [vmem:[%s177 + $0x88] sm:$0xff]
        %v220 = vld [vmem:[%s177 + $0x90] sm:$0xff]
        %v221 = vld [vmem:[%s177 + $0x98] sm:$0xff]
        %v222 = vld [vmem:[%s177 + $0xa0] sm:$0xff]
        %v223 = vld [vmem:[%s177 + $0xa8] sm:$0xff]
        %v224 = vld [vmem:[%s177 + $0xb0] sm:$0xff]
        %v225 = vld [vmem:[%s177 + $0xb8] sm:$0xff]
        %v226 = vld [vmem:[%s177 + $0xc0] sm:$0xff]
        %v227 = vld [vmem:[%s177 + $0xc8] sm:$0xff]
        %v228 = vld [vmem:[%s177 + $0xd0] sm:$0xff]
        %v229 = vld [vmem:[%s177 + $0xd8] sm:$0xff]
        %v230 = vld [vmem:[%s177 + $0xe0] sm:$0xff]
        %v231 = vld [vmem:[%s177 + $0xe8] sm:$0xff]
        %v232 = vld [vmem:[%s177 + $0xf0] sm:$0xff]
        %v233 = vld [vmem:[%s177 + $0xf8] sm:$0xff]
        %v234 = vld [vmem:[%s177 + $0x100] sm:$0xff]
        %v235 = vld [vmem:[%s177 + $0x108] sm:$0xff]
        %v236 = vld [vmem:[%s177 + $0x110] sm:$0xff]
        %v237 = vld [vmem:[%s177 + $0x118] sm:$0xff]
        %v238 = vld [vmem:[%s177 + $0x120] sm:$0xff]
        %v239 = vld [vmem:[%s177 + $0x128] sm:$0xff]
        %v240 = vld [vmem:[%s177 + $0x130] sm:$0xff]
        %v241 = vld [vmem:[%s177 + $0x138] sm:$0xff]
        %v242 = vld [vmem:[%s177 + $0x140] sm:$0xff]
        %v243 = vld [vmem:[%s177 + $0x148] sm:$0xff]
        %v244 = vld [vmem:[%s177 + $0x150] sm:$0xff]
        %v245 = vld [vmem:[%s177 + $0x158] sm:$0xff]
        %v246 = vld [vmem:[%s177 + $0x160] sm:$0xff]
        %v247 = vld [vmem:[%s177 + $0x168] sm:$0xff]
        %v248 = vld [vmem:[%s177 + $0x170] sm:$0xff]
        %v249 = vld [vmem:[%s177 + $0x178] sm:$0xff]
        %v250 = vld [vmem:[%s177 + $0x180] sm:$0xff]
        %v251 = vld [vmem:[%s177 + $0x188] sm:$0xff]
        %v252 = vld [vmem:[%s177 + $0x190] sm:$0xff]
        %v253 = vld [vmem:[%s177 + $0x198] sm:$0xff]
        %v254 = vld [vmem:[%s177 + $0x1a0] sm:$0xff]
        %v255 = vld [vmem:[%s177 + $0x1a8] sm:$0xff]
        %v256 = vld [vmem:[%s177 + $0x1b0] sm:$0xff]
        %v257 = vld [vmem:[%s177 + $0x1b8] sm:$0xff]
        %v258 = vld [vmem:[%s177 + $0x1c0] sm:$0xff]
        %v259 = vld [vmem:[%s177 + $0x1c8] sm:$0xff]
        %v260 = vld [vmem:[%s177 + $0x1d0] sm:$0xff]
        %v261 = vld [vmem:[%s177 + $0x1d8] sm:$0xff]
        %v262 = vld [vmem:[%s177 + $0x1e0] sm:$0xff]
        %v263 = vld [vmem:[%s177 + $0x1e8] sm:$0xff]
        %v264 = vld [vmem:[%s177 + $0x1f0] sm:$0xff]
        %v265 = vld [vmem:[%s177 + $0x1f8] sm:$0xff]
        %v266 = vld [vmem:[%s177 + $0x200] sm:$0xff]
        %v267 = vld [vmem:[%s177 + $0x208] sm:$0xff]
        %v268 = vld [vmem:[%s177 + $0x210] sm:$0xff]
        %v269 = vld [vmem:[%s177 + $0x218] sm:$0xff]
        %v270 = vld [vmem:[%s177 + $0x220] sm:$0xff]
        %v271 = vld [vmem:[%s177 + $0x228] sm:$0xff]
        %v272 = vld [vmem:[%s177 + $0x230] sm:$0xff]
        %v273 = vld [vmem:[%s177 + $0x238] sm:$0xff]
        %v274 = vld [vmem:[%s177 + $0x240] sm:$0xff]
        %v275 = vld [vmem:[%s177 + $0x248] sm:$0xff]
        %v276 = vld [vmem:[%s177 + $0x250] sm:$0xff]
        %v277 = vld [vmem:[%s177 + $0x258] sm:$0xff]
        %v278 = vld [vmem:[%s177 + $0x260] sm:$0xff]
        %v279 = vld [vmem:[%s177 + $0x268] sm:$0xff]
        %v280 = vld [vmem:[%s177 + $0x270] sm:$0xff]
        %v281 = vld [vmem:[%s177 + $0x278] sm:$0xff]
        %v282 = vld [vmem:[%s177 + $0x280] sm:$0xff]
        %v283 = vld [vmem:[%s177 + $0x288] sm:$0xff]
        %v284 = vld [vmem:[%s177 + $0x290] sm:$0xff]
        %v285 = vld [vmem:[%s177 + $0x298] sm:$0xff]
        %v286 = vld [vmem:[%s177 + $0x2a0] sm:$0xff]
        %v287 = vld [vmem:[%s177 + $0x2a8] sm:$0xff]
        %v288 = vld [vmem:[%s177 + $0x2b0] sm:$0xff]
        %v289 = vld [vmem:[%s177 + $0x2b8] sm:$0xff]
        %v290 = vld [vmem:[%s177 + $0x2c0] sm:$0xff]
        %v291 = vld [vmem:[%s177 + $0x2c8] sm:$0xff]
        %v292 = vld [vmem:[%s177 + $0x2d0] sm:$0xff]
        %v293 = vld [vmem:[%s177 + $0x2d8] sm:$0xff]
        %v294 = vld [vmem:[%s177 + $0x2e0] sm:$0xff]
        %v295 = vld [vmem:[%s177 + $0x2e8] sm:$0xff]
        %v296 = vld [vmem:[%s177 + $0x2f0] sm:$0xff]
        %v297 = vld [vmem:[%s177 + $0x2f8] sm:$0xff]
        %v298 = vld [vmem:[%s177 + $0x300] sm:$0xff]
        %v299 = vld [vmem:[%s177 + $0x308] sm:$0xff]
        %v300 = vld [vmem:[%s177 + $0x310] sm:$0xff]
        %v301 = vld [vmem:[%s177 + $0x318] sm:$0xff]
        %v302 = vld [vmem:[%s177 + $0x320] sm:$0xff]
        %v303 = vld [vmem:[%s177 + $0x328] sm:$0xff]
        %v304 = vld [vmem:[%s177 + $0x330] sm:$0xff]
        %v305 = vld [vmem:[%s177 + $0x338] sm:$0xff]
        %v306 = vld [vmem:[%s177 + $0x340] sm:$0xff]
        %v307 = vld [vmem:[%s177 + $0x348] sm:$0xff]
        %v308 = vld [vmem:[%s177 + $0x350] sm:$0xff]
        %v309 = vld [vmem:[%s177 + $0x358] sm:$0xff]
        %v310 = vld [vmem:[%s177 + $0x360] sm:$0xff]
        %v311 = vld [vmem:[%s177 + $0x368] sm:$0xff]
        %v312 = vld [vmem:[%s177 + $0x370] sm:$0xff]
        %v313 = vld [vmem:[%s177 + $0x378] sm:$0xff]
        %v314 = vld [vmem:[%s177 + $0x380] sm:$0xff]
        %v315 = vld [vmem:[%s177 + $0x388] sm:$0xff]
        %v316 = vld [vmem:[%s177 + $0x390] sm:$0xff]
        %v317 = vld [vmem:[%s177 + $0x398] sm:$0xff]
        %v318 = vld [vmem:[%s177 + $0x3a0] sm:$0xff]
        %v319 = vld [vmem:[%s177 + $0x3a8] sm:$0xff]
        %v320 = vld [vmem:[%s177 + $0x3b0] sm:$0xff]
        %v321 = vld [vmem:[%s177 + $0x3b8] sm:$0xff]
        %v322 = vld [vmem:[%s177 + $0x3c0] sm:$0xff]
        %v323 = vld [vmem:[%s177 + $0x3c8] sm:$0xff]
        %v324 = vld [vmem:[%s177 + $0x3d0] sm:$0xff]
        %v325 = vld [vmem:[%s177 + $0x3d8] sm:$0xff]
        %v326 = vld [vmem:[%s177 + $0x3e0] sm:$0xff]
        %v327 = vld [vmem:[%s177 + $0x3e8] sm:$0xff]
        %v328 = vld [vmem:[%s177 + $0x3f0] sm:$0xff]
        %v329 = vld [vmem:[%s177 + $0x3f8] sm:$0xff]
        %330 = vmatprep.subr.mxu0 %v233
        %331 = vmatpush1.xpose.msra.mxu0 %v232
        %332 = vmatprep.subr.mxu0 %v231
        %333 = vmatpush1.xpose.msra.mxu0 %v230
        %334 = vmatprep.subr.mxu0 %v229
        %335 = vmatpush1.xpose.msra.mxu0 %v228
        %336 = vmatprep.subr.mxu0 %v227
        %337 = vmatpush1.xpose.msra.mxu0 %v226
        %338 = vmatprep.subr.mxu0 %v225
        %339 = vmatpush1.xpose.msra.mxu0 %v224
        %340 = vmatprep.subr.mxu0 %v223
        %341 = vmatpush1.xpose.msra.mxu0 %v222
        %342 = vmatprep.subr.mxu0 %v221
        %343 = vmatpush1.xpose.msra.mxu0 %v220
        %344 = vmatprep.subr.mxu0 %v219
        %345 = vmatpush1.xpose.msra.mxu0 %v218
        %346 = vmatprep.subr.mxu0 %v217
        %347 = vmatpush1.xpose.msra.mxu0 %v216
        %348 = vmatprep.subr.mxu0 %v215
        %349 = vmatpush1.xpose.msra.mxu0 %v214
        %350 = vmatprep.subr.mxu0 %v213
        %351 = vmatpush1.xpose.msra.mxu0 %v212
        %352 = vmatprep.subr.mxu0 %v211
        %353 = vmatpush1.xpose.msra.mxu0 %v210
        %354 = vmatprep.subr.mxu0 %v209
        %355 = vmatpush1.xpose.msra.mxu0 %v208
        %356 = vmatprep.subr.mxu0 %v207
        %357 = vmatpush1.xpose.msra.mxu0 %v206
        %358 = vmatprep.subr.mxu0 %v205
        %359 = vmatpush1.xpose.msra.mxu0 %v204
        %360 = vmatprep.subr.mxu0 %v203
        %361 = vmatpush1.xpose.msra.mxu0 %v202
        %362 = vmatprep.subr.mxu0 %v265
        %363 = vmatpush2.xpose.msra.mxu0 %v264
        %364 = vmatprep.subr.mxu0 %v263
        %365 = vmatpush2.xpose.msra.mxu0 %v262
        %366 = vmatprep.subr.mxu0 %v261
        %367 = vmatpush2.xpose.msra.mxu0 %v260
        %368 = vmatprep.subr.mxu0 %v259
        %369 = vmatpush2.xpose.msra.mxu0 %v258
        %370 = vmatprep.subr.mxu0 %v257
        %371 = vmatpush2.xpose.msra.mxu0 %v256
        %372 = vmatprep.subr.mxu0 %v255
        %373 = vmatpush2.xpose.msra.mxu0 %v254
        %374 = vmatprep.subr.mxu0 %v253
        %375 = vmatpush2.xpose.msra.mxu0 %v252
        %376 = vmatprep.subr.mxu0 %v251
        %377 = vmatpush2.xpose.msra.mxu0 %v250
        %378 = vmatprep.subr.mxu0 %v249
        %379 = vmatpush2.xpose.msra.mxu0 %v248
        %380 = vmatprep.subr.mxu0 %v247
        %381 = vmatpush2.xpose.msra.mxu0 %v246
        %382 = vmatprep.subr.mxu0 %v245
        %383 = vmatpush2.xpose.msra.mxu0 %v244
        %384 = vmatprep.subr.mxu0 %v243
        %385 = vmatpush2.xpose.msra.mxu0 %v242
        %386 = vmatprep.subr.mxu0 %v241
        %387 = vmatpush2.xpose.msra.mxu0 %v240
        %388 = vmatprep.subr.mxu0 %v239
        %389 = vmatpush2.xpose.msra.mxu0 %v238
        %390 = vmatprep.subr.mxu0 %v237
        %391 = vmatpush2.xpose.msra.mxu0 %v236
        %392 = vmatprep.subr.mxu0 %v235
        %393 = vmatpush2.xpose.msra.mxu0 %v234
        %394 = vmatprep.mubr.f32.mxu0 %v201
        %395 = vmatmul.mubr.f32.gmra.mxu0 %v200
        %v396 = vpop.f32.mrf.mxu0
        %v397 = vadd.f32 0.0, %v396
        %v398 = vpop.f32.mrf.mxu0
        %v399 = vadd.f32 0.0, %v398
        %400 = vdwg.mxu0
        %401 = vmatprep.subr.mxu0 %v297
        %402 = vmatpush1.xpose.msra.mxu0 %v296
        %403 = vmatprep.subr.mxu0 %v295
        %404 = vmatpush1.xpose.msra.mxu0 %v294
        %405 = vmatprep.subr.mxu0 %v293
        %406 = vmatpush1.xpose.msra.mxu0 %v292
        %407 = vmatprep.subr.mxu0 %v291
        %408 = vmatpush1.xpose.msra.mxu0 %v290
        %409 = vmatprep.subr.mxu0 %v289
        %410 = vmatpush1.xpose.msra.mxu0 %v288
        %411 = vmatprep.subr.mxu0 %v287
        %412 = vmatpush1.xpose.msra.mxu0 %v286
        %413 = vmatprep.subr.mxu0 %v285
        %414 = vmatpush1.xpose.msra.mxu0 %v284
        %415 = vmatprep.subr.mxu0 %v283
        %416 = vmatpush1.xpose.msra.mxu0 %v282
        %417 = vmatprep.subr.mxu0 %v281
        %418 = vmatpush1.xpose.msra.mxu0 %v280
        %419 = vmatprep.subr.mxu0 %v279
        %420 = vmatpush1.xpose.msra.mxu0 %v278
        %421 = vmatprep.subr.mxu0 %v277
        %422 = vmatpush1.xpose.msra.mxu0 %v276
        %423 = vmatprep.subr.mxu0 %v275
        %424 = vmatpush1.xpose.msra.mxu0 %v274
        %425 = vmatprep.subr.mxu0 %v273
        %426 = vmatpush1.xpose.msra.mxu0 %v272
        %427 = vmatprep.subr.mxu0 %v271
        %428 = vmatpush1.xpose.msra.mxu0 %v270
        %429 = vmatprep.subr.mxu0 %v269
        %430 = vmatpush1.xpose.msra.mxu0 %v268
        %431 = vmatprep.subr.mxu0 %v267
        %432 = vmatpush1.xpose.msra.mxu0 %v266
        %433 = vmatprep.subr.mxu0 %v329
        %434 = vmatpush2.xpose.msra.mxu0 %v328
        %435 = vmatprep.subr.mxu0 %v327
        %436 = vmatpush2.xpose.msra.mxu0 %v326
        %437 = vmatprep.subr.mxu0 %v325
        %438 = vmatpush2.xpose.msra.mxu0 %v324
        %439 = vmatprep.subr.mxu0 %v323
        %440 = vmatpush2.xpose.msra.mxu0 %v322
        %441 = vmatprep.subr.mxu0 %v321
        %442 = vmatpush2.xpose.msra.mxu0 %v320
        %443 = vmatprep.subr.mxu0 %v319
        %444 = vmatpush2.xpose.msra.mxu0 %v318
        %445 = vmatprep.subr.mxu0 %v317
        %446 = vmatpush2.xpose.msra.mxu0 %v316
        %447 = vmatprep.subr.mxu0 %v315
        %448 = vmatpush2.xpose.msra.mxu0 %v314
        %449 = vmatprep.subr.mxu0 %v313
        %450 = vmatpush2.xpose.msra.mxu0 %v312
        %451 = vmatprep.subr.mxu0 %v311
        %452 = vmatpush2.xpose.msra.mxu0 %v310
        %453 = vmatprep.subr.mxu0 %v309
        %454 = vmatpush2.xpose.msra.mxu0 %v308
        %455 = vmatprep.subr.mxu0 %v307
        %456 = vmatpush2.xpose.msra.mxu0 %v306
        %457 = vmatprep.subr.mxu0 %v305
        %458 = vmatpush2.xpose.msra.mxu0 %v304
        %459 = vmatprep.subr.mxu0 %v303
        %460 = vmatpush2.xpose.msra.mxu0 %v302
        %461 = vmatprep.subr.mxu0 %v301
        %462 = vmatpush2.xpose.msra.mxu0 %v300
        %463 = vmatprep.subr.mxu0 %v299
        %464 = vmatpush2.xpose.msra.mxu0 %v298
        %465 = vmatprep.mubr.f32.mxu0 %v201
        %466 = vmatmul.mubr.f32.gmra.mxu0 %v200
        %v467 = vpop.f32.mrf.mxu0
        %v468 = vadd.f32 0.0, %v467
        %v469 = vpop.f32.mrf.mxu0
        %v470 = vadd.f32 0.0, %v469
        %471 = vdwg.mxu0
        %vm472 = vcmp.gt.f32.partialorder %v397, 0.0
        %vm473 = vcmp.gt.f32.partialorder %v399, 0.0
        %vm474 = vcmp.gt.f32.partialorder %v468, 0.0
        %vm475 = vcmp.gt.f32.partialorder %v470, 0.0
        %v476 = vsel %vm472, 1.0, -1.0
        %v477 = vsel %vm473, 1.0, -1.0
        %v478 = vsel %vm474, 1.0, -1.0
        %v479 = vsel %vm475, 1.0, -1.0
        %480 = vst [vmem:[%s197] sm:$0xff] %v476
        %481 = vst [vmem:[%s197 + $0x8] sm:$0xff] %v477
        %482 = vst [vmem:[%s197 + $0x10] sm:$0xff] %v478
        %483 = vst [vmem:[%s197 + $0x18] sm:$0xff] %v479
        %s484 = sand.u32 %s94, 1
        %s485 = scalar_lea.sflag [#allocation4], %s484
        %s486 = sand.u32 %s94, 1
        %s487 = smul.addr %s486, 32
        %s488 = scalar_lea.vmem [#allocation7], %s487
        // Predicated region
        $region37: #{encoder_forward.1} parent=27 // pred_check
          %p489 = pneg %p104
        $region38: #{encoder_forward.1} parent=27 // pred_check_branch
          %491 = sbr.rel (%p489) target = $region40
        $region39: #{encoder_forward.1} parent=27 // pred_region
          %s492 = smul.u32 4, %s24
          %s494 = ssub.s32 512, 512
          %495 = vsyncadd %s485, %s494
          %s496 = smul.addr %s25, 8
          %s497 = sadd.s32 %s492, %s496
          %s498 = smul.addr %s497, 128
          %s499 = scalar_lea.hbm %s2, %s498
          %s501 = sshll.u32 %s488, 4
          %s502 = int_to_ptr.vmem [resolvable:$true] %s501
          %504 = dma.vmem_to_hbm [thread:$0]  %s502, 512, %s499, %s485
        $region40: #{encoder_forward.1} parent=27 // pred_fallthru
          _
      $region28: #{encoder_forward.1} parent=5 // pred_fallthru
        _
      %p505 = scmp.le.s32.totalorder 2, %s15
      // Predicated region
      $region41: #{encoder_forward.1} parent=5 // pred_check
        %p506 = pneg %p505
      $region42: #{encoder_forward.1} parent=5 // pred_check_branch
        %508 = sbr.rel (%p506) target = $region44
      $region43: #{encoder_forward.1} parent=5 // pred_region
        %s509 = ssub.s32 %s15, 2
        // Predicated region
        $region45: #{encoder_forward.1} parent=43 // pred_check
          %p510 = pneg %p110
        $region46: #{encoder_forward.1} parent=43 // pred_check_branch
          %512 = sbr.rel (%p510) target = $region48
        $region47: #{encoder_forward.1} parent=43 // pred_region
          %s513 = sand.u32 %s95, 1
          %s514 = scalar_lea.sflag [#allocation4], %s513
          %s515 = sand.u32 %s95, 1
          %s516 = smul.addr %s515, 32
          %s517 = scalar_lea.vmem [#allocation7], %s516
          %518 = dma.done %s514, 512
        $region48: #{encoder_forward.1} parent=43 // pred_fallthru
          _
      $region44: #{encoder_forward.1} parent=5 // pred_fallthru
        _
    $region6: #{encoder_forward.1} parent=1 // loop_footer
      %s19 = sadd.s32 1, %s15
    $region7: #{encoder_forward.1} parent=1 // loop_footer_branch
      %14 = sbr.rel target = $region3
    $region8: #{encoder_forward.1} parent=1 // loop_exit
      _
    %519 = vsyncpa [#allocation3], 1
    %s520 = scalar_lea.sflag [#allocation3], 1
    %521 = vsyncpa %s520, 1
    %522 = vsyncpa [#allocation6], 1
    %s523 = scalar_lea.sflag [#allocation6], 1
    %524 = vsyncpa %s523, 1
    %525 = vsyncpa [#allocation4], 1
    %s526 = scalar_lea.sflag [#allocation4], 1
    %527 = vsyncpa %s526, 1

</llo_original>
